<compile_context>
chip_gen: v5e
topology: v5e:2x2
jax: 0.10.0
libtpu: 0.0.40
codegen_flags: <defaults>
</compile_context>

<pallas_src>
import functools

import jax
import jax.numpy as jnp
from jax.experimental import pallas as pl
from jax.experimental.pallas import tpu as pltpu

# CleanRL SAC constants
LOG_STD_MAX = 2.0
LOG_STD_MIN = -5.0

HIDDEN = 256
HEAD_PAD = 128          # each head (mean / log_std) padded to 128 lanes
MAX_TB = 256            # batch tile for large B


def _round_up(n, m):
    return ((n + m - 1) // m) * m


def _actor_kernel(x_ref, w1_ref, b1_ref, w2_ref, b2_ref, wh_ref, bh_ref,
                  mean_ref, ls_ref):
    bf16 = jnp.bfloat16
    f32 = jnp.float32

    x = x_ref[...].astype(bf16)

    # fc1 + relu  (bf16 MXU inputs, f32 accumulate, f32 elementwise)
    h1 = jnp.dot(x, w1_ref[...], preferred_element_type=f32) + b1_ref[...]
    h1 = jnp.maximum(h1, 0.0).astype(bf16)

    # fc2 + relu
    h2 = jnp.dot(h1, w2_ref[...], preferred_element_type=f32) + b2_ref[...]
    h2 = jnp.maximum(h2, 0.0).astype(bf16)

    # fused heads: one (256, 2*HEAD_PAD) matmul, then split at lane 128
    heads = jnp.dot(h2, wh_ref[...], preferred_element_type=f32) + bh_ref[...]
    mean = heads[:, :HEAD_PAD]
    ls = jnp.tanh(heads[:, HEAD_PAD:])
    ls = LOG_STD_MIN + 0.5 * (LOG_STD_MAX - LOG_STD_MIN) * (ls + 1.0)

    mean_ref[...] = mean
    ls_ref[...] = ls


def prepare_kernel_params(p):
    """Logical f32 params (w1,b1,w2,b2,wm,bm,wl,bl) -> kernel params.

    Weights go to bf16; head weights/biases are zero-padded to 128 lanes each
    and fused into a single (256, 256) weight / (1, 256) bias.
    """
    act_dim = p["wm"].shape[1]
    f32, bf16 = jnp.float32, jnp.bfloat16

    wm_p = jnp.zeros((HIDDEN, HEAD_PAD), f32).at[:, :act_dim].set(p["wm"])
    wl_p = jnp.zeros((HIDDEN, HEAD_PAD), f32).at[:, :act_dim].set(p["wl"])
    bm_p = jnp.zeros((1, HEAD_PAD), f32).at[:, :act_dim].set(p["bm"])
    bl_p = jnp.zeros((1, HEAD_PAD), f32).at[:, :act_dim].set(p["bl"])

    return dict(
        w1=p["w1"].astype(bf16), b1=p["b1"].astype(f32),
        w2=p["w2"].astype(bf16), b2=p["b2"].astype(f32),
        wh=jnp.concatenate([wm_p, wl_p], axis=1).astype(bf16),
        bh=jnp.concatenate([bm_p, bl_p], axis=1).astype(f32),
    ), act_dim


@functools.partial(jax.jit, static_argnames=("act_dim",))
def actor_forward(x, kp, act_dim):
    """x: (B, obs_dim) float32. kp: prepared kernel params. Returns (mean, log_std)."""
    B, obs_dim = x.shape

    # Batch tiling: small batches -> single tile; big batches -> 256-row tiles
    # pipelined over a parallel grid (weights stay VMEM-resident).
    TB = min(MAX_TB, _round_up(B, 8))
    B_pad = _round_up(B, TB)
    if B_pad != B:
        x = jnp.pad(x, ((0, B_pad - B), (0, 0)))
    grid = (B_pad // TB,)

    resident = lambda a: pl.BlockSpec(a.shape, lambda i: (0, 0))

    flops = 2 * B_pad * (obs_dim * HIDDEN + HIDDEN * HIDDEN + HIDDEN * 2 * HEAD_PAD)
    bytes_accessed = (
        x.size * 4
        + kp["w1"].size * 2 + kp["w2"].size * 2 + kp["wh"].size * 2
        + kp["b1"].size * 4 + kp["b2"].size * 4 + kp["bh"].size * 4
        + 2 * B_pad * HEAD_PAD * 4
    )

    mean_pad, ls_pad = pl.pallas_call(
        _actor_kernel,
        grid=grid,
        out_shape=(
            jax.ShapeDtypeStruct((B_pad, HEAD_PAD), jnp.float32),
            jax.ShapeDtypeStruct((B_pad, HEAD_PAD), jnp.float32),
        ),
        in_specs=[
            pl.BlockSpec((TB, obs_dim), lambda i: (i, 0)),   # x: tiled over batch
            resident(kp["w1"]), resident(kp["b1"]),
            resident(kp["w2"]), resident(kp["b2"]),
            resident(kp["wh"]), resident(kp["bh"]),
        ],
        out_specs=(
            pl.BlockSpec((TB, HEAD_PAD), lambda i: (i, 0)),
            pl.BlockSpec((TB, HEAD_PAD), lambda i: (i, 0)),
        ),
        compiler_params=pltpu.CompilerParams(
            dimension_semantics=("parallel",)),
        cost_estimate=pl.CostEstimate(
            flops=flops,
            transcendentals=B_pad * HEAD_PAD,
            bytes_accessed=bytes_accessed),
    )(x, kp["w1"], kp["b1"], kp["w2"], kp["b2"], kp["wh"], kp["bh"])

    return mean_pad[:B, :act_dim], ls_pad[:B, :act_dim]


def init_actor_params(key, obs_dim, act_dim):
    """Deterministic synthetic init, PyTorch-Linear-style U(-1/sqrt(fan_in), +1/sqrt(fan_in))."""
    ks = jax.random.split(key, 8)

    def lin(kw, kb, fan_in, fan_out):
        bound = 1.0 / jnp.sqrt(float(fan_in))
        w = jax.random.uniform(kw, (fan_in, fan_out), jnp.float32, -bound, bound)
        b = jax.random.uniform(kb, (1, fan_out), jnp.float32, -bound, bound)
        return w, b

    w1, b1 = lin(ks[0], ks[1], obs_dim, HIDDEN)
    w2, b2 = lin(ks[2], ks[3], HIDDEN, HIDDEN)
    wm, bm = lin(ks[4], ks[5], HIDDEN, act_dim)
    wl, bl = lin(ks[6], ks[7], HIDDEN, act_dim)
    return dict(w1=w1, b1=b1, w2=w2, b2=b2, wm=wm, bm=bm, wl=wl, bl=bl)


def actor_forward_ref(x, p):
    """Pure-JAX reference matching the kernel's numerics (bf16 operands, f32 acc)."""
    bf16, f32 = jnp.bfloat16, jnp.float32

    def mm(a, w):
        return jnp.dot(a.astype(bf16), w.astype(bf16), preferred_element_type=f32)

    h1 = jnp.maximum(mm(x, p["w1"]) + p["b1"], 0.0)
    h2 = jnp.maximum(mm(h1, p["w2"]) + p["b2"], 0.0)
    mean = mm(h2, p["wm"]) + p["bm"]
    ls = jnp.tanh(mm(h2, p["wl"]) + p["bl"])
    ls = LOG_STD_MIN + 0.5 * (LOG_STD_MAX - LOG_STD_MIN) * (ls + 1.0)
    return mean, ls


if __name__ == "__main__":
    key = jax.random.PRNGKey(0)
    k_x, k_p = jax.random.split(key)

    B = 8          # batch of observations
    OBS_DIM = 16   # flat observation size
    ACT_DIM = 4    # flat action size

    x = jax.random.normal(k_x, (B, OBS_DIM), dtype=jnp.float32)
    params = init_actor_params(k_p, OBS_DIM, ACT_DIM)
    kparams, act_dim = prepare_kernel_params(params)

    mean, log_std = actor_forward(x, kparams, act_dim)
    jax.block_until_ready((mean, log_std))

    mean_ref, log_std_ref = actor_forward_ref(x, params)
    assert mean.shape == (B, ACT_DIM) and log_std.shape == (B, ACT_DIM)
    assert jnp.allclose(mean, mean_ref, atol=2e-3, rtol=2e-3)
    assert jnp.allclose(log_std, log_std_ref, atol=2e-3, rtol=2e-3)
    assert jnp.all(log_std >= LOG_STD_MIN - 1e-5) and jnp.all(log_std <= LOG_STD_MAX + 1e-5)

    # Also exercise the multi-tile (grid > 1), non-multiple batch path.
    B2 = 300
    x2 = jax.random.normal(k_x, (B2, OBS_DIM), dtype=jnp.float32)
    mean2, log_std2 = actor_forward(x2, kparams, act_dim)
    jax.block_until_ready((mean2, log_std2))
    mean2_ref, log_std2_ref = actor_forward_ref(x2, params)
    assert jnp.allclose(mean2, mean2_ref, atol=2e-3, rtol=2e-3)
    assert jnp.allclose(log_std2, log_std2_ref, atol=2e-3, rtol=2e-3)

    print("KERNEL_OK")
</pallas_src>

<mosaic_0001>
module attributes {stable_mosaic.version = 11 : i64} {
  func.func @_actor_kernel(%arg0: i32, %arg1: memref<8x16xf32, #tpu.memory_space<vmem>>, %arg2: memref<16x256xbf16, #tpu.memory_space<vmem>>, %arg3: memref<1x256xf32, #tpu.memory_space<vmem>>, %arg4: memref<256x256xbf16, #tpu.memory_space<vmem>>, %arg5: memref<1x256xf32, #tpu.memory_space<vmem>>, %arg6: memref<256x256xbf16, #tpu.memory_space<vmem>>, %arg7: memref<1x256xf32, #tpu.memory_space<vmem>>, %arg8: memref<8x128xf32, #tpu.memory_space<vmem>>, %arg9: memref<8x128xf32, #tpu.memory_space<vmem>>) attributes {dimension_semantics = [#tpu.dimension_semantics<parallel>], iteration_bounds = array<i64: 1>, scalar_prefetch = 0 : i64, scratch_operands = 0 : i64, tpu.core_type = #tpu.core_type<tc>, window_params = [{transform_indices = @transform_0, window_bounds = array<i64: 8, 16>}, {pipeline_mode = #tpu.pipeline_mode<synchronous>, transform_indices = @transform_1, window_bounds = array<i64: 16, 256>}, {pipeline_mode = #tpu.pipeline_mode<synchronous>, transform_indices = @transform_2, window_bounds = array<i64: 1, 256>}, {pipeline_mode = #tpu.pipeline_mode<synchronous>, transform_indices = @transform_3, window_bounds = array<i64: 256, 256>}, {pipeline_mode = #tpu.pipeline_mode<synchronous>, transform_indices = @transform_4, window_bounds = array<i64: 1, 256>}, {pipeline_mode = #tpu.pipeline_mode<synchronous>, transform_indices = @transform_5, window_bounds = array<i64: 256, 256>}, {pipeline_mode = #tpu.pipeline_mode<synchronous>, transform_indices = @transform_6, window_bounds = array<i64: 1, 256>}, {transform_indices = @transform_7, window_bounds = array<i64: 8, 128>}, {transform_indices = @transform_8, window_bounds = array<i64: 8, 128>}]} {
    %c0 = arith.constant 0 : index
    %c0_0 = arith.constant 0 : index
    %0 = vector.load %arg1[%c0, %c0_0] : memref<8x16xf32, #tpu.memory_space<vmem>>, vector<8x16xf32>
    %1 = arith.truncf %0 : vector<8x16xf32> to vector<8x16xbf16>
    %c0_1 = arith.constant 0 : index
    %c0_2 = arith.constant 0 : index
    %2 = vector.load %arg2[%c0_1, %c0_2] : memref<16x256xbf16, #tpu.memory_space<vmem>>, vector<16x256xbf16>
    %cst = arith.constant dense<0.000000e+00> : vector<8x256xf32>
    %3 = tpu.matmul %1, %2, %cst {dimension_numbers = #tpu.dot_dimension_numbers<[1], [0], [0], [1], [0, 0, 1, 1], [], []>} : vector<8x16xbf16>, vector<16x256xbf16>, vector<8x256xf32> -> vector<8x256xf32>
    %c0_3 = arith.constant 0 : index
    %c0_4 = arith.constant 0 : index
    %4 = vector.load %arg3[%c0_3, %c0_4] : memref<1x256xf32, #tpu.memory_space<vmem>>, vector<1x256xf32>
    %5 = vector.broadcast %4 : vector<1x256xf32> to vector<8x256xf32>
    %6 = arith.addf %3, %5 : vector<8x256xf32>
    %cst_5 = arith.constant 0.000000e+00 : f32
    %7 = vector.broadcast %cst_5 : f32 to vector<8x256xf32>
    %8 = arith.maximumf %6, %7 : vector<8x256xf32>
    %9 = arith.truncf %8 : vector<8x256xf32> to vector<8x256xbf16>
    %c0_6 = arith.constant 0 : index
    %c0_7 = arith.constant 0 : index
    %10 = vector.load %arg4[%c0_6, %c0_7] : memref<256x256xbf16, #tpu.memory_space<vmem>>, vector<256x256xbf16>
    %cst_8 = arith.constant dense<0.000000e+00> : vector<8x256xf32>
    %11 = tpu.matmul %9, %10, %cst_8 {dimension_numbers = #tpu.dot_dimension_numbers<[1], [0], [0], [1], [0, 0, 1, 1], [], []>} : vector<8x256xbf16>, vector<256x256xbf16>, vector<8x256xf32> -> vector<8x256xf32>
    %c0_9 = arith.constant 0 : index
    %c0_10 = arith.constant 0 : index
    %12 = vector.load %arg5[%c0_9, %c0_10] : memref<1x256xf32, #tpu.memory_space<vmem>>, vector<1x256xf32>
    %13 = vector.broadcast %12 : vector<1x256xf32> to vector<8x256xf32>
    %14 = arith.addf %11, %13 : vector<8x256xf32>
    %cst_11 = arith.constant 0.000000e+00 : f32
    %15 = vector.broadcast %cst_11 : f32 to vector<8x256xf32>
    %16 = arith.maximumf %14, %15 : vector<8x256xf32>
    %17 = arith.truncf %16 : vector<8x256xf32> to vector<8x256xbf16>
    %c0_12 = arith.constant 0 : index
    %c0_13 = arith.constant 0 : index
    %18 = vector.load %arg6[%c0_12, %c0_13] : memref<256x256xbf16, #tpu.memory_space<vmem>>, vector<256x256xbf16>
    %cst_14 = arith.constant dense<0.000000e+00> : vector<8x256xf32>
    %19 = tpu.matmul %17, %18, %cst_14 {dimension_numbers = #tpu.dot_dimension_numbers<[1], [0], [0], [1], [0, 0, 1, 1], [], []>} : vector<8x256xbf16>, vector<256x256xbf16>, vector<8x256xf32> -> vector<8x256xf32>
    %c0_15 = arith.constant 0 : index
    %c0_16 = arith.constant 0 : index
    %20 = vector.load %arg7[%c0_15, %c0_16] : memref<1x256xf32, #tpu.memory_space<vmem>>, vector<1x256xf32>
    %21 = vector.broadcast %20 : vector<1x256xf32> to vector<8x256xf32>
    %22 = arith.addf %19, %21 : vector<8x256xf32>
    %23 = vector.extract_strided_slice %22 {offsets = [0, 0], sizes = [8, 128], strides = [1, 1]} : vector<8x256xf32> to vector<8x128xf32>
    %24 = vector.extract_strided_slice %22 {offsets = [0, 128], sizes = [8, 128], strides = [1, 1]} : vector<8x256xf32> to vector<8x128xf32>
    %25 = math.tanh %24 : vector<8x128xf32>
    %cst_17 = arith.constant 1.000000e+00 : f32
    %26 = vector.broadcast %cst_17 : f32 to vector<8x128xf32>
    %27 = arith.addf %25, %26 : vector<8x128xf32>
    %cst_18 = arith.constant 3.500000e+00 : f32
    %28 = vector.broadcast %cst_18 : f32 to vector<8x128xf32>
    %29 = arith.mulf %28, %27 : vector<8x128xf32>
    %cst_19 = arith.constant -5.000000e+00 : f32
    %30 = vector.broadcast %cst_19 : f32 to vector<8x128xf32>
    %31 = arith.addf %30, %29 : vector<8x128xf32>
    %c0_20 = arith.constant 0 : index
    %c0_21 = arith.constant 0 : index
    %32 = vector.load %arg8[%c0_20, %c0_21] : memref<8x128xf32, #tpu.memory_space<vmem>>, vector<8x128xf32>
    tpu.vector_store %arg8[%c0_20, %c0_21], %23 {strides = array<i32>} : memref<8x128xf32, #tpu.memory_space<vmem>>, vector<8x128xf32>,
    %c0_22 = arith.constant 0 : index
    %c0_23 = arith.constant 0 : index
    %33 = vector.load %arg9[%c0_22, %c0_23] : memref<8x128xf32, #tpu.memory_space<vmem>>, vector<8x128xf32>
    tpu.vector_store %arg9[%c0_22, %c0_23], %31 {strides = array<i32>} : memref<8x128xf32, #tpu.memory_space<vmem>>, vector<8x128xf32>,
    return
  }
  func.func @transform_0(%arg0: i32) -> (i32, i32) {
    %c0_i32 = arith.constant 0 : i32
    %c0_i32_0 = arith.constant 0 : i32
    return %arg0, %c0_i32 : i32, i32
  }
  func.func @transform_1(%arg0: i32) -> (i32, i32) {
    %c0_i32 = arith.constant 0 : i32
    %c0_i32_0 = arith.constant 0 : i32
    %c0_i32_1 = arith.constant 0 : i32
    return %c0_i32, %c0_i32_0 : i32, i32
  }
  func.func @transform_2(%arg0: i32) -> (i32, i32) {
    %c0_i32 = arith.constant 0 : i32
    %c0_i32_0 = arith.constant 0 : i32
    %c0_i32_1 = arith.constant 0 : i32
    return %c0_i32, %c0_i32_0 : i32, i32
  }
  func.func @transform_3(%arg0: i32) -> (i32, i32) {
    %c0_i32 = arith.constant 0 : i32
    %c0_i32_0 = arith.constant 0 : i32
    %c0_i32_1 = arith.constant 0 : i32
    return %c0_i32, %c0_i32_0 : i32, i32
  }
  func.func @transform_4(%arg0: i32) -> (i32, i32) {
    %c0_i32 = arith.constant 0 : i32
    %c0_i32_0 = arith.constant 0 : i32
    %c0_i32_1 = arith.constant 0 : i32
    return %c0_i32, %c0_i32_0 : i32, i32
  }
  func.func @transform_5(%arg0: i32) -> (i32, i32) {
    %c0_i32 = arith.constant 0 : i32
    %c0_i32_0 = arith.constant 0 : i32
    %c0_i32_1 = arith.constant 0 : i32
    return %c0_i32, %c0_i32_0 : i32, i32
  }
  func.func @transform_6(%arg0: i32) -> (i32, i32) {
    %c0_i32 = arith.constant 0 : i32
    %c0_i32_0 = arith.constant 0 : i32
    %c0_i32_1 = arith.constant 0 : i32
    return %c0_i32, %c0_i32_0 : i32, i32
  }
  func.func @transform_7(%arg0: i32) -> (i32, i32) {
    %c0_i32 = arith.constant 0 : i32
    %c0_i32_0 = arith.constant 0 : i32
    return %arg0, %c0_i32 : i32, i32
  }
  func.func @transform_8(%arg0: i32) -> (i32, i32) {
    %c0_i32 = arith.constant 0 : i32
    %c0_i32_0 = arith.constant 0 : i32
    return %arg0, %c0_i32 : i32, i32
  }
}

</mosaic_0001>

<llo_original>
// kernel: actor_forward.1
$region0: #{actor_forward.1}
  #allocation0 [shape = 'u32[]', space=smem, size = 0x4, offset = 0x4, fixed_abs, tag = 'smem constant byte address 0x4 - core index']
  #allocation1 [shape = 'u32[72,128]{1,0:T(1,128)}', space=vmem, size = 0x9000, scoped, tag = 'internal scratch']
  %s0 = inlined_call_operand.hbm [shape: f32[8,16], index: 0, kind: input, shape index: {}]
  %s1 = inlined_call_operand.hbm [shape: bf16[16,256], index: 1, kind: input, shape index: {}]
  %s2 = inlined_call_operand.hbm [shape: f32[1,256], index: 2, kind: input, shape index: {}]
  %s3 = inlined_call_operand.hbm [shape: bf16[256,256], index: 3, kind: input, shape index: {}]
  %s4 = inlined_call_operand.hbm [shape: f32[1,256], index: 4, kind: input, shape index: {}]
  %s5 = inlined_call_operand.hbm [shape: bf16[256,256], index: 5, kind: input, shape index: {}]
  %s6 = inlined_call_operand.vmem [shape: f32[1,256], index: 6, kind: input, shape index: {}]
  %s7 = inlined_call_operand.vmem [shape: f32[8,128], index: 7, kind: output, shape index: {0}]
  %s8 = inlined_call_operand.vmem [shape: f32[8,128], index: 8, kind: output, shape index: {1}]
  %9 = xla_tuple %s7, %s8
  %s10 = sld [smem:[#allocation0]]
  $region70: #{actor_forward.1} parent=0
    _
  %s12 = ssub.s32 1, %s10
  %s13 = scalar_select 0, %s12, %s10
  $region1: #{actor_forward.1} parent=0
    #allocation2 [shape = 'u8[4096]{0}', space=vmem, size = 0x1000, scoped, tag = 'input window, operand 0, single buffered']
    #allocation3 [shape = 's32[1]{0}', space=sflag, size = 0x4, scoped, tag = 'scoped memory for actor_forward.1']
    #allocation4 [shape = 'u8[8192]{0}', space=vmem, size = 0x2000, scoped, tag = 'input window, operand 1, single buffered']
    #allocation5 [shape = 's32[1]{0}', space=sflag, size = 0x4, scoped, tag = 'scoped memory for actor_forward.1']
    #allocation6 [shape = 'u8[1024]{0}', space=vmem, size = 0x400, scoped, tag = 'input window, operand 2, single buffered']
    #allocation7 [shape = 'u8[131072]{0}', space=vmem, size = 0x20000, scoped, tag = 'input window, operand 3, single buffered']
    #allocation8 [shape = 's32[1]{0}', space=sflag, size = 0x4, scoped, tag = 'scoped memory for actor_forward.1']
    #allocation9 [shape = 'u8[1024]{0}', space=vmem, size = 0x400, scoped, tag = 'input window, operand 4, single buffered']
    #allocation10 [shape = 'u8[131072]{0}', space=vmem, size = 0x20000, scoped, tag = 'input window, operand 5, single buffered']
    #allocation11 [shape = 's32[1]{0}', space=sflag, size = 0x4, scoped, tag = 'scoped memory for actor_forward.1']
    %14 = vsyncpa [#allocation3], 0
    %15 = vsyncpa [#allocation5], 0
    %16 = vsyncpa [#allocation8], 0
    %17 = vsyncpa [#allocation11], 0
    // Predicated region
    $region2: #{actor_forward.1} parent=1 // pred_check
      _
    $region3: #{actor_forward.1} parent=1 // pred_check_branch
      %19 = sbr.rel (0) target = $region5
    $region4: #{actor_forward.1} parent=1 // pred_region
      %21 = vsyncadd [#allocation3], 0
      %s23 = sshll.u32 %s0, 4
      %s24 = int_to_ptr.hbm [resolvable:$true] %s23
      %s25 = sshll.u32 [#allocation2], 4
      %s26 = int_to_ptr.vmem [resolvable:$true] %s25
      %28 = dma.hbm_to_vmem [thread:$0]  %s24, 128, %s26, [#allocation3]
    $region5: #{actor_forward.1} parent=1 // pred_fallthru
      _
    // Predicated region
    $region6: #{actor_forward.1} parent=1 // pred_check
      _
    $region7: #{actor_forward.1} parent=1 // pred_check_branch
      %30 = sbr.rel (0) target = $region9
    $region8: #{actor_forward.1} parent=1 // pred_region
      %32 = vsyncadd [#allocation5], 0
      %s33 = sshll.u32 %s1, 4
      %s34 = int_to_ptr.hbm [resolvable:$true] %s33
      %s35 = sshll.u32 [#allocation4], 4
      %s36 = int_to_ptr.vmem [resolvable:$true] %s35
      %41 = dma.hbm_to_vmem [thread:$0]  %s34, 256, %s36, [#allocation5], 128, 128, 8
    $region9: #{actor_forward.1} parent=1 // pred_fallthru
      _
    // Predicated region
    $region10: #{actor_forward.1} parent=1 // pred_check
      _
    $region11: #{actor_forward.1} parent=1 // pred_check_branch
      %43 = sbr.rel (0) target = $region13
    $region12: #{actor_forward.1} parent=1 // pred_region
      %45 = vsyncadd [#allocation5], 0
      %s47 = sshll.u32 %s2, 4
      %s48 = int_to_ptr.hbm [resolvable:$true] %s47
      %s49 = sshll.u32 [#allocation6], 4
      %s50 = int_to_ptr.vmem [resolvable:$true] %s49
      %52 = dma.hbm_to_vmem [thread:$0]  %s48, 32, %s50, [#allocation5]
    $region13: #{actor_forward.1} parent=1 // pred_fallthru
      _
    // Predicated region
    $region14: #{actor_forward.1} parent=1 // pred_check
      _
    $region15: #{actor_forward.1} parent=1 // pred_check_branch
      %54 = sbr.rel (0) target = $region17
    $region16: #{actor_forward.1} parent=1 // pred_region
      %56 = vsyncadd [#allocation8], 0
      %s57 = sshll.u32 %s3, 4
      %s58 = int_to_ptr.hbm [resolvable:$true] %s57
      %s59 = sshll.u32 [#allocation7], 4
      %s60 = int_to_ptr.vmem [resolvable:$true] %s59
      %65 = dma.hbm_to_vmem [thread:$0]  %s58, 4096, %s60, [#allocation8], 128, 128, 8
    $region17: #{actor_forward.1} parent=1 // pred_fallthru
      _
    // Predicated region
    $region18: #{actor_forward.1} parent=1 // pred_check
      _
    $region19: #{actor_forward.1} parent=1 // pred_check_branch
      %67 = sbr.rel (0) target = $region21
    $region20: #{actor_forward.1} parent=1 // pred_region
      %69 = vsyncadd [#allocation8], 0
      %s71 = sshll.u32 %s4, 4
      %s72 = int_to_ptr.hbm [resolvable:$true] %s71
      %s73 = sshll.u32 [#allocation9], 4
      %s74 = int_to_ptr.vmem [resolvable:$true] %s73
      %76 = dma.hbm_to_vmem [thread:$0]  %s72, 32, %s74, [#allocation8]
    $region21: #{actor_forward.1} parent=1 // pred_fallthru
      _
    // Predicated region
    $region22: #{actor_forward.1} parent=1 // pred_check
      _
    $region23: #{actor_forward.1} parent=1 // pred_check_branch
      %78 = sbr.rel (0) target = $region25
    $region24: #{actor_forward.1} parent=1 // pred_region
      %80 = vsyncadd [#allocation11], 0
      %s81 = sshll.u32 %s5, 4
      %s82 = int_to_ptr.hbm [resolvable:$true] %s81
      %s83 = sshll.u32 [#allocation10], 4
      %s84 = int_to_ptr.vmem [resolvable:$true] %s83
      %89 = dma.hbm_to_vmem [thread:$0]  %s82, 4096, %s84, [#allocation11], 128, 128, 8
    $region25: #{actor_forward.1} parent=1 // pred_fallthru
      _
    // Predicated region
    $region26: #{actor_forward.1} parent=1 // pred_check
      _
    $region27: #{actor_forward.1} parent=1 // pred_check_branch
      %91 = sbr.rel (0) target = $region29
    $region28: #{actor_forward.1} parent=1 // pred_region
      _
    $region29: #{actor_forward.1} parent=1 // pred_fallthru
      _
    // Predicated region
    $region30: #{actor_forward.1} parent=1 // pred_check
      _
    $region31: #{actor_forward.1} parent=1 // pred_check_branch
      %93 = sbr.rel (0) target = $region33
    $region32: #{actor_forward.1} parent=1 // pred_region
      %95 = dma.done [#allocation3], 128
    $region33: #{actor_forward.1} parent=1 // pred_fallthru
      _
    // Predicated region
    $region34: #{actor_forward.1} parent=1 // pred_check
      _
    $region35: #{actor_forward.1} parent=1 // pred_check_branch
      %97 = sbr.rel (0) target = $region37
    $region36: #{actor_forward.1} parent=1 // pred_region
      %99 = dma.done [#allocation5], 256
    $region37: #{actor_forward.1} parent=1 // pred_fallthru
      _
    // Predicated region
    $region38: #{actor_forward.1} parent=1 // pred_check
      _
    $region39: #{actor_forward.1} parent=1 // pred_check_branch
      %101 = sbr.rel (0) target = $region41
    $region40: #{actor_forward.1} parent=1 // pred_region
      %103 = dma.done [#allocation5], 32
    $region41: #{actor_forward.1} parent=1 // pred_fallthru
      _
    // Predicated region
    $region42: #{actor_forward.1} parent=1 // pred_check
      _
    $region43: #{actor_forward.1} parent=1 // pred_check_branch
      %105 = sbr.rel (0) target = $region45
    $region44: #{actor_forward.1} parent=1 // pred_region
      %107 = dma.done [#allocation8], 4096
    $region45: #{actor_forward.1} parent=1 // pred_fallthru
      _
    // Predicated region
    $region46: #{actor_forward.1} parent=1 // pred_check
      _
    $region47: #{actor_forward.1} parent=1 // pred_check_branch
      %109 = sbr.rel (0) target = $region49
    $region48: #{actor_forward.1} parent=1 // pred_region
      %111 = dma.done [#allocation8], 32
    $region49: #{actor_forward.1} parent=1 // pred_fallthru
      _
    // Predicated region
    $region50: #{actor_forward.1} parent=1 // pred_check
      _
    $region51: #{actor_forward.1} parent=1 // pred_check_branch
      %113 = sbr.rel (0) target = $region53
    $region52: #{actor_forward.1} parent=1 // pred_region
      %115 = dma.done [#allocation11], 4096
    $region53: #{actor_forward.1} parent=1 // pred_fallthru
      _
    %v117 = vld [vmem:[#allocation2] sm:$0xff]
    %v118 = vpack.c.bf16 %v117, %v117
    %v119 = vld [vmem:[#allocation4] sm:$0xff]
    %v120 = vld [vmem:[#allocation4 + $0x8] sm:$0xff]
    %v121 = vld [vmem:[#allocation6] sm:$0x3]
    %v123 = vperm.slane %v121, 0
    %v124 = vperm.slane %v121, 1
    %v129 = vunpack.c.l.b16 %v119
    %v130 = vunpack.c.h.b16 %v119
    %v131 = vunpack.c.l.b16 %v120
    %v132 = vunpack.c.h.b16 %v120
    %v133 = vpack.c.b16 %v131, %v129
    %v134 = vpack.c.b16 %v132, %v130
    %vm137 = vcmask 130048
    %v139 = vsel %vm137, %v118, 0
    %141 = vmatpush.bf16.msra.mxu0 0
    %142 = vmatpush.bf16.msra.mxu0 0
    %143 = vmatpush.bf16.msra.mxu0 0
    %144 = vmatpush.bf16.msra.mxu0 0
    %145 = vmatpush.bf16.msra.mxu0 0
    %146 = vmatpush.bf16.msra.mxu0 0
    %147 = vmatpush.bf16.msra.mxu0 0
    %148 = vmatpush.bf16.msra.mxu0 %v133
    %149 = vmatmul.bf16.gmra.mxu0 %v139
    %v150 = vpop.f32.mrf.mxu0
    %v151 = vadd.f32 %v123, %v150
    %v152 = vpop.f32.mrf.mxu0
    %153 = vdwg.mxu0
    %154 = vmatpush.bf16.msra.mxu0 0
    %155 = vmatpush.bf16.msra.mxu0 0
    %156 = vmatpush.bf16.msra.mxu0 0
    %157 = vmatpush.bf16.msra.mxu0 0
    %158 = vmatpush.bf16.msra.mxu0 0
    %159 = vmatpush.bf16.msra.mxu0 0
    %160 = vmatpush.bf16.msra.mxu0 0
    %161 = vmatpush.bf16.msra.mxu0 %v134
    %162 = vmatmul.bf16.gmra.mxu0 %v139
    %v163 = vpop.f32.mrf.mxu0
    %v164 = vadd.f32 %v124, %v163
    %v165 = vpop.f32.mrf.mxu0
    %166 = vdwg.mxu0
    %v167 = vmax.f32 %v151, 0.0
    %v168 = vmax.f32 %v164, 0.0
    %v169 = vpack.c.bf16 %v167, %v167
    %v170 = vpack.c.bf16 %v168, %v168
    %v171 = vld [vmem:[#allocation7] sm:$0xff]
    %v172 = vld [vmem:[#allocation7 + $0x8] sm:$0xff]
    %v173 = vld [vmem:[#allocation7 + $0x10] sm:$0xff]
    %v174 = vld [vmem:[#allocation7 + $0x18] sm:$0xff]
    %v175 = vld [vmem:[#allocation7 + $0x20] sm:$0xff]
    %v176 = vld [vmem:[#allocation7 + $0x28] sm:$0xff]
    %v177 = vld [vmem:[#allocation7 + $0x30] sm:$0xff]
    %v178 = vld [vmem:[#allocation7 + $0x38] sm:$0xff]
    %v179 = vld [vmem:[#allocation7 + $0x40] sm:$0xff]
    %v180 = vld [vmem:[#allocation7 + $0x48] sm:$0xff]
    %v181 = vld [vmem:[#allocation7 + $0x50] sm:$0xff]
    %v182 = vld [vmem:[#allocation7 + $0x58] sm:$0xff]
    %v183 = vld [vmem:[#allocation7 + $0x60] sm:$0xff]
    %v184 = vld [vmem:[#allocation7 + $0x68] sm:$0xff]
    %v185 = vld [vmem:[#allocation7 + $0x70] sm:$0xff]
    %v186 = vld [vmem:[#allocation7 + $0x78] sm:$0xff]
    %v187 = vld [vmem:[#allocation7 + $0x80] sm:$0xff]
    %v188 = vld [vmem:[#allocation7 + $0x88] sm:$0xff]
    %v189 = vld [vmem:[#allocation7 + $0x90] sm:$0xff]
    %v190 = vld [vmem:[#allocation7 + $0x98] sm:$0xff]
    %v191 = vld [vmem:[#allocation7 + $0xa0] sm:$0xff]
    %v192 = vld [vmem:[#allocation7 + $0xa8] sm:$0xff]
    %v193 = vld [vmem:[#allocation7 + $0xb0] sm:$0xff]
    %v194 = vld [vmem:[#allocation7 + $0xb8] sm:$0xff]
    %v195 = vld [vmem:[#allocation7 + $0xc0] sm:$0xff]
    %v196 = vld [vmem:[#allocation7 + $0xc8] sm:$0xff]
    %v197 = vld [vmem:[#allocation7 + $0xd0] sm:$0xff]
    %v198 = vld [vmem:[#allocation7 + $0xd8] sm:$0xff]
    %v199 = vld [vmem:[#allocation7 + $0xe0] sm:$0xff]
    %v200 = vld [vmem:[#allocation7 + $0xe8] sm:$0xff]
    %v201 = vld [vmem:[#allocation7 + $0xf0] sm:$0xff]
    %v202 = vld [vmem:[#allocation7 + $0xf8] sm:$0xff]
    %v203 = vld [vmem:[#allocation9] sm:$0x3]
    %v205 = vperm.slane %v203, 0
    %v206 = vperm.slane %v203, 1
    %v241 = vunpack.c.l.b16 %v171
    %v242 = vunpack.c.h.b16 %v171
    %v243 = vunpack.c.l.b16 %v172
    %v244 = vunpack.c.h.b16 %v172
    %v245 = vunpack.c.l.b16 %v173
    %v246 = vunpack.c.h.b16 %v173
    %v247 = vunpack.c.l.b16 %v174
    %v248 = vunpack.c.h.b16 %v174
    %v249 = vunpack.c.l.b16 %v175
    %v250 = vunpack.c.h.b16 %v175
    %v251 = vunpack.c.l.b16 %v176
    %v252 = vunpack.c.h.b16 %v176
    %v253 = vunpack.c.l.b16 %v177
    %v254 = vunpack.c.h.b16 %v177
    %v255 = vunpack.c.l.b16 %v178
    %v256 = vunpack.c.h.b16 %v178
    %v257 = vunpack.c.l.b16 %v179
    %v258 = vunpack.c.h.b16 %v179
    %v259 = vunpack.c.l.b16 %v180
    %v260 = vunpack.c.h.b16 %v180
    %v261 = vunpack.c.l.b16 %v181
    %v262 = vunpack.c.h.b16 %v181
    %v263 = vunpack.c.l.b16 %v182
    %v264 = vunpack.c.h.b16 %v182
    %v265 = vunpack.c.l.b16 %v183
    %v266 = vunpack.c.h.b16 %v183
    %v267 = vunpack.c.l.b16 %v184
    %v268 = vunpack.c.h.b16 %v184
    %v269 = vunpack.c.l.b16 %v185
    %v270 = vunpack.c.h.b16 %v185
    %v271 = vunpack.c.l.b16 %v186
    %v272 = vunpack.c.h.b16 %v186
    %v273 = vunpack.c.l.b16 %v187
    %v274 = vunpack.c.h.b16 %v187
    %v275 = vunpack.c.l.b16 %v188
    %v276 = vunpack.c.h.b16 %v188
    %v277 = vunpack.c.l.b16 %v189
    %v278 = vunpack.c.h.b16 %v189
    %v279 = vunpack.c.l.b16 %v190
    %v280 = vunpack.c.h.b16 %v190
    %v281 = vunpack.c.l.b16 %v191
    %v282 = vunpack.c.h.b16 %v191
    %v283 = vunpack.c.l.b16 %v192
    %v284 = vunpack.c.h.b16 %v192
    %v285 = vunpack.c.l.b16 %v193
    %v286 = vunpack.c.h.b16 %v193
    %v287 = vunpack.c.l.b16 %v194
    %v288 = vunpack.c.h.b16 %v194
    %v289 = vunpack.c.l.b16 %v195
    %v290 = vunpack.c.h.b16 %v195
    %v291 = vunpack.c.l.b16 %v196
    %v292 = vunpack.c.h.b16 %v196
    %v293 = vunpack.c.l.b16 %v197
    %v294 = vunpack.c.h.b16 %v197
    %v295 = vunpack.c.l.b16 %v198
    %v296 = vunpack.c.h.b16 %v198
    %v297 = vunpack.c.l.b16 %v199
    %v298 = vunpack.c.h.b16 %v199
    %v299 = vunpack.c.l.b16 %v200
    %v300 = vunpack.c.h.b16 %v200
    %v301 = vunpack.c.l.b16 %v201
    %v302 = vunpack.c.h.b16 %v201
    %v303 = vunpack.c.l.b16 %v202
    %v304 = vunpack.c.h.b16 %v202
    %v305 = vpack.c.b16 %v243, %v241
    %v306 = vpack.c.b16 %v244, %v242
    %v307 = vpack.c.b16 %v247, %v245
    %v308 = vpack.c.b16 %v248, %v246
    %v309 = vpack.c.b16 %v251, %v249
    %v310 = vpack.c.b16 %v252, %v250
    %v311 = vpack.c.b16 %v255, %v253
    %v312 = vpack.c.b16 %v256, %v254
    %v313 = vpack.c.b16 %v259, %v257
    %v314 = vpack.c.b16 %v260, %v258
    %v315 = vpack.c.b16 %v263, %v261
    %v316 = vpack.c.b16 %v264, %v262
    %v317 = vpack.c.b16 %v267, %v265
    %v318 = vpack.c.b16 %v268, %v266
    %v319 = vpack.c.b16 %v271, %v269
    %v320 = vpack.c.b16 %v272, %v270
    %v321 = vpack.c.b16 %v275, %v273
    %v322 = vpack.c.b16 %v276, %v274
    %v323 = vpack.c.b16 %v279, %v277
    %v324 = vpack.c.b16 %v280, %v278
    %v325 = vpack.c.b16 %v283, %v281
    %v326 = vpack.c.b16 %v284, %v282
    %v327 = vpack.c.b16 %v287, %v285
    %v328 = vpack.c.b16 %v288, %v286
    %v329 = vpack.c.b16 %v291, %v289
    %v330 = vpack.c.b16 %v292, %v290
    %v331 = vpack.c.b16 %v295, %v293
    %v332 = vpack.c.b16 %v296, %v294
    %v333 = vpack.c.b16 %v299, %v297
    %v334 = vpack.c.b16 %v300, %v298
    %v335 = vpack.c.b16 %v303, %v301
    %v336 = vpack.c.b16 %v304, %v302
    %369 = vmatpush.bf16.msra.mxu0 %v319
    %370 = vmatpush.bf16.msra.mxu0 %v317
    %371 = vmatpush.bf16.msra.mxu0 %v315
    %372 = vmatpush.bf16.msra.mxu0 %v313
    %373 = vmatpush.bf16.msra.mxu0 %v311
    %374 = vmatpush.bf16.msra.mxu0 %v309
    %375 = vmatpush.bf16.msra.mxu0 %v307
    %376 = vmatpush.bf16.msra.mxu0 %v305
    %377 = vmatmul.bf16.gmra.mxu0 %v169
    %v378 = vpop.f32.mrf.mxu0
    %v379 = vadd.f32 %v205, %v378
    %v380 = vpop.f32.mrf.mxu0
    %381 = vdwg.mxu0
    %382 = vmatpush.bf16.msra.mxu0 %v335
    %383 = vmatpush.bf16.msra.mxu0 %v333
    %384 = vmatpush.bf16.msra.mxu0 %v331
    %385 = vmatpush.bf16.msra.mxu0 %v329
    %386 = vmatpush.bf16.msra.mxu0 %v327
    %387 = vmatpush.bf16.msra.mxu0 %v325
    %388 = vmatpush.bf16.msra.mxu0 %v323
    %389 = vmatpush.bf16.msra.mxu0 %v321
    %390 = vmatmul.bf16.gmra.mxu0 %v170
    %v391 = vpop.f32.mrf.mxu0
    %v392 = vadd.f32 %v379, %v391
    %v393 = vpop.f32.mrf.mxu0
    %394 = vdwg.mxu0
    %395 = vmatpush.bf16.msra.mxu0 %v320
    %396 = vmatpush.bf16.msra.mxu0 %v318
    %397 = vmatpush.bf16.msra.mxu0 %v316
    %398 = vmatpush.bf16.msra.mxu0 %v314
    %399 = vmatpush.bf16.msra.mxu0 %v312
    %400 = vmatpush.bf16.msra.mxu0 %v310
    %401 = vmatpush.bf16.msra.mxu0 %v308
    %402 = vmatpush.bf16.msra.mxu0 %v306
    %403 = vmatmul.bf16.gmra.mxu0 %v169
    %v404 = vpop.f32.mrf.mxu0
    %v405 = vadd.f32 %v206, %v404
    %v406 = vpop.f32.mrf.mxu0
    %407 = vdwg.mxu0
    %408 = vmatpush.bf16.msra.mxu0 %v336
    %409 = vmatpush.bf16.msra.mxu0 %v334
    %410 = vmatpush.bf16.msra.mxu0 %v332
    %411 = vmatpush.bf16.msra.mxu0 %v330
    %412 = vmatpush.bf16.msra.mxu0 %v328
    %413 = vmatpush.bf16.msra.mxu0 %v326
    %414 = vmatpush.bf16.msra.mxu0 %v324
    %415 = vmatpush.bf16.msra.mxu0 %v322
    %416 = vmatmul.bf16.gmra.mxu0 %v170
    %v417 = vpop.f32.mrf.mxu0
    %v418 = vadd.f32 %v405, %v417
    %v419 = vpop.f32.mrf.mxu0
    %420 = vdwg.mxu0
    %v421 = vmax.f32 %v392, 0.0
    %v422 = vmax.f32 %v418, 0.0
    %v423 = vpack.c.bf16 %v421, %v421
    %v424 = vpack.c.bf16 %v422, %v422
    %v425 = vld [vmem:[#allocation10] sm:$0xff]
    %v426 = vld [vmem:[#allocation10 + $0x8] sm:$0xff]
    %v427 = vld [vmem:[#allocation10 + $0x10] sm:$0xff]
    %v428 = vld [vmem:[#allocation10 + $0x18] sm:$0xff]
    %v429 = vld [vmem:[#allocation10 + $0x20] sm:$0xff]
    %v430 = vld [vmem:[#allocation10 + $0x28] sm:$0xff]
    %v431 = vld [vmem:[#allocation10 + $0x30] sm:$0xff]
    %v432 = vld [vmem:[#allocation10 + $0x38] sm:$0xff]
    %v433 = vld [vmem:[#allocation10 + $0x40] sm:$0xff]
    %v434 = vld [vmem:[#allocation10 + $0x48] sm:$0xff]
    %v435 = vld [vmem:[#allocation10 + $0x50] sm:$0xff]
    %v436 = vld [vmem:[#allocation10 + $0x58] sm:$0xff]
    %v437 = vld [vmem:[#allocation10 + $0x60] sm:$0xff]
    %v438 = vld [vmem:[#allocation10 + $0x68] sm:$0xff]
    %v439 = vld [vmem:[#allocation10 + $0x70] sm:$0xff]
    %v440 = vld [vmem:[#allocation10 + $0x78] sm:$0xff]
    %v441 = vld [vmem:[#allocation10 + $0x80] sm:$0xff]
    %v442 = vld [vmem:[#allocation10 + $0x88] sm:$0xff]
    %v443 = vld [vmem:[#allocation10 + $0x90] sm:$0xff]
    %v444 = vld [vmem:[#allocation10 + $0x98] sm:$0xff]
    %v445 = vld [vmem:[#allocation10 + $0xa0] sm:$0xff]
    %v446 = vld [vmem:[#allocation10 + $0xa8] sm:$0xff]
    %v447 = vld [vmem:[#allocation10 + $0xb0] sm:$0xff]
    %v448 = vld [vmem:[#allocation10 + $0xb8] sm:$0xff]
    %v449 = vld [vmem:[#allocation10 + $0xc0] sm:$0xff]
    %v450 = vld [vmem:[#allocation10 + $0xc8] sm:$0xff]
    %v451 = vld [vmem:[#allocation10 + $0xd0] sm:$0xff]
    %v452 = vld [vmem:[#allocation10 + $0xd8] sm:$0xff]
    %v453 = vld [vmem:[#allocation10 + $0xe0] sm:$0xff]
    %v454 = vld [vmem:[#allocation10 + $0xe8] sm:$0xff]
    %v455 = vld [vmem:[#allocation10 + $0xf0] sm:$0xff]
    %v456 = vld [vmem:[#allocation10 + $0xf8] sm:$0xff]
    %v457 = vld [vmem:[%s6] sm:$0x3]
    %v459 = vperm.slane %v457, 0
    %v460 = vperm.slane %v457, 1
    %v495 = vunpack.c.l.b16 %v425
    %v496 = vunpack.c.h.b16 %v425
    %v497 = vunpack.c.l.b16 %v426
    %v498 = vunpack.c.h.b16 %v426
    %v499 = vunpack.c.l.b16 %v427
    %v500 = vunpack.c.h.b16 %v427
    %v501 = vunpack.c.l.b16 %v428
    %v502 = vunpack.c.h.b16 %v428
    %v503 = vunpack.c.l.b16 %v429
    %v504 = vunpack.c.h.b16 %v429
    %v505 = vunpack.c.l.b16 %v430
    %v506 = vunpack.c.h.b16 %v430
    %v507 = vunpack.c.l.b16 %v431
    %v508 = vunpack.c.h.b16 %v431
    %v509 = vunpack.c.l.b16 %v432
    %v510 = vunpack.c.h.b16 %v432
    %v511 = vunpack.c.l.b16 %v433
    %v512 = vunpack.c.h.b16 %v433
    %v513 = vunpack.c.l.b16 %v434
    %v514 = vunpack.c.h.b16 %v434
    %v515 = vunpack.c.l.b16 %v435
    %v516 = vunpack.c.h.b16 %v435
    %v517 = vunpack.c.l.b16 %v436
    %v518 = vunpack.c.h.b16 %v436
    %v519 = vunpack.c.l.b16 %v437
    %v520 = vunpack.c.h.b16 %v437
    %v521 = vunpack.c.l.b16 %v438
    %v522 = vunpack.c.h.b16 %v438
    %v523 = vunpack.c.l.b16 %v439
    %v524 = vunpack.c.h.b16 %v439
    %v525 = vunpack.c.l.b16 %v440
    %v526 = vunpack.c.h.b16 %v440
    %v527 = vunpack.c.l.b16 %v441
    %v528 = vunpack.c.h.b16 %v441
    %v529 = vunpack.c.l.b16 %v442
    %v530 = vunpack.c.h.b16 %v442
    %v531 = vunpack.c.l.b16 %v443
    %v532 = vunpack.c.h.b16 %v443
    %v533 = vunpack.c.l.b16 %v444
    %v534 = vunpack.c.h.b16 %v444
    %v535 = vunpack.c.l.b16 %v445
    %v536 = vunpack.c.h.b16 %v445
    %v537 = vunpack.c.l.b16 %v446
    %v538 = vunpack.c.h.b16 %v446
    %v539 = vunpack.c.l.b16 %v447
    %v540 = vunpack.c.h.b16 %v447
    %v541 = vunpack.c.l.b16 %v448
    %v542 = vunpack.c.h.b16 %v448
    %v543 = vunpack.c.l.b16 %v449
    %v544 = vunpack.c.h.b16 %v449
    %v545 = vunpack.c.l.b16 %v450
    %v546 = vunpack.c.h.b16 %v450
    %v547 = vunpack.c.l.b16 %v451
    %v548 = vunpack.c.h.b16 %v451
    %v549 = vunpack.c.l.b16 %v452
    %v550 = vunpack.c.h.b16 %v452
    %v551 = vunpack.c.l.b16 %v453
    %v552 = vunpack.c.h.b16 %v453
    %v553 = vunpack.c.l.b16 %v454
    %v554 = vunpack.c.h.b16 %v454
    %v555 = vunpack.c.l.b16 %v455
    %v556 = vunpack.c.h.b16 %v455
    %v557 = vunpack.c.l.b16 %v456
    %v558 = vunpack.c.h.b16 %v456
    %v559 = vpack.c.b16 %v497, %v495
    %v560 = vpack.c.b16 %v498, %v496
    %v561 = vpack.c.b16 %v501, %v499
    %v562 = vpack.c.b16 %v502, %v500
    %v563 = vpack.c.b16 %v505, %v503
    %v564 = vpack.c.b16 %v506, %v504
    %v565 = vpack.c.b16 %v509, %v507
    %v566 = vpack.c.b16 %v510, %v508
    %v567 = vpack.c.b16 %v513, %v511
    %v568 = vpack.c.b16 %v514, %v512
    %v569 = vpack.c.b16 %v517, %v515
    %v570 = vpack.c.b16 %v518, %v516
    %v571 = vpack.c.b16 %v521, %v519
    %v572 = vpack.c.b16 %v522, %v520
    %v573 = vpack.c.b16 %v525, %v523
    %v574 = vpack.c.b16 %v526, %v524
    %v575 = vpack.c.b16 %v529, %v527
    %v576 = vpack.c.b16 %v530, %v528
    %v577 = vpack.c.b16 %v533, %v531
    %v578 = vpack.c.b16 %v534, %v532
    %v579 = vpack.c.b16 %v537, %v535
    %v580 = vpack.c.b16 %v538, %v536
    %v581 = vpack.c.b16 %v541, %v539
    %v582 = vpack.c.b16 %v542, %v540
    %v583 = vpack.c.b16 %v545, %v543
    %v584 = vpack.c.b16 %v546, %v544
    %v585 = vpack.c.b16 %v549, %v547
    %v586 = vpack.c.b16 %v550, %v548
    %v587 = vpack.c.b16 %v553, %v551
    %v588 = vpack.c.b16 %v554, %v552
    %v589 = vpack.c.b16 %v557, %v555
    %v590 = vpack.c.b16 %v558, %v556
    %623 = vmatpush.bf16.msra.mxu0 %v573
    %624 = vmatpush.bf16.msra.mxu0 %v571
    %625 = vmatpush.bf16.msra.mxu0 %v569
    %626 = vmatpush.bf16.msra.mxu0 %v567
    %627 = vmatpush.bf16.msra.mxu0 %v565
    %628 = vmatpush.bf16.msra.mxu0 %v563
    %629 = vmatpush.bf16.msra.mxu0 %v561
    %630 = vmatpush.bf16.msra.mxu0 %v559
    %631 = vmatmul.bf16.gmra.mxu0 %v423
    %v632 = vpop.f32.mrf.mxu0
    %v633 = vadd.f32 %v459, %v632
    %v634 = vpop.f32.mrf.mxu0
    %635 = vdwg.mxu0
    %636 = vmatpush.bf16.msra.mxu0 %v589
    %637 = vmatpush.bf16.msra.mxu0 %v587
    %638 = vmatpush.bf16.msra.mxu0 %v585
    %639 = vmatpush.bf16.msra.mxu0 %v583
    %640 = vmatpush.bf16.msra.mxu0 %v581
    %641 = vmatpush.bf16.msra.mxu0 %v579
    %642 = vmatpush.bf16.msra.mxu0 %v577
    %643 = vmatpush.bf16.msra.mxu0 %v575
    %644 = vmatmul.bf16.gmra.mxu0 %v424
    %v645 = vpop.f32.mrf.mxu0
    %v646 = vadd.f32 %v633, %v645
    %v647 = vpop.f32.mrf.mxu0
    %648 = vdwg.mxu0
    %649 = vmatpush.bf16.msra.mxu0 %v574
    %650 = vmatpush.bf16.msra.mxu0 %v572
    %651 = vmatpush.bf16.msra.mxu0 %v570
    %652 = vmatpush.bf16.msra.mxu0 %v568
    %653 = vmatpush.bf16.msra.mxu0 %v566
    %654 = vmatpush.bf16.msra.mxu0 %v564
    %655 = vmatpush.bf16.msra.mxu0 %v562
    %656 = vmatpush.bf16.msra.mxu0 %v560
    %657 = vmatmul.bf16.gmra.mxu0 %v423
    %v658 = vpop.f32.mrf.mxu0
    %v659 = vadd.f32 %v460, %v658
    %v660 = vpop.f32.mrf.mxu0
    %661 = vdwg.mxu0
    %662 = vmatpush.bf16.msra.mxu0 %v590
    %663 = vmatpush.bf16.msra.mxu0 %v588
    %664 = vmatpush.bf16.msra.mxu0 %v586
    %665 = vmatpush.bf16.msra.mxu0 %v584
    %666 = vmatpush.bf16.msra.mxu0 %v582
    %667 = vmatpush.bf16.msra.mxu0 %v580
    %668 = vmatpush.bf16.msra.mxu0 %v578
    %669 = vmatpush.bf16.msra.mxu0 %v576
    %670 = vmatmul.bf16.gmra.mxu0 %v424
    %v671 = vpop.f32.mrf.mxu0
    %v672 = vadd.f32 %v659, %v671
    %v673 = vpop.f32.mrf.mxu0
    %674 = vdwg.mxu0
    %v675 = vtanh.pop %v672
    %v676 = vadd.f32 %v675, 1.0
    %v677 = vmul.f32 %v676, 3.5
    %v678 = vadd.f32 %v677, -5.0
    %679 = vst [vmem:[%s7] sm:$0xff] %v646
    %680 = vst [vmem:[%s8] sm:$0xff] %v678
    // Predicated region
    $region54: #{actor_forward.1} parent=1 // pred_check
      _
    $region55: #{actor_forward.1} parent=1 // pred_check_branch
      %682 = sbr.rel (0) target = $region57
    $region56: #{actor_forward.1} parent=1 // pred_region
      _
    $region57: #{actor_forward.1} parent=1 // pred_fallthru
      _
    // Predicated region
    $region58: #{actor_forward.1} parent=1 // pred_check
      _
    $region59: #{actor_forward.1} parent=1 // pred_check_branch
      %684 = sbr.rel (0) target = $region61
    $region60: #{actor_forward.1} parent=1 // pred_region
      _
    $region61: #{actor_forward.1} parent=1 // pred_fallthru
      _
    // Predicated region
    $region62: #{actor_forward.1} parent=1 // pred_check
      _
    $region63: #{actor_forward.1} parent=1 // pred_check_branch
      %686 = sbr.rel (0) target = $region65
    $region64: #{actor_forward.1} parent=1 // pred_region
      _
    $region65: #{actor_forward.1} parent=1 // pred_fallthru
      _
    // Predicated region
    $region66: #{actor_forward.1} parent=1 // pred_check
      _
    $region67: #{actor_forward.1} parent=1 // pred_check_branch
      %688 = sbr.rel (0) target = $region69
    $region68: #{actor_forward.1} parent=1 // pred_region
      _
    $region69: #{actor_forward.1} parent=1 // pred_fallthru
      _
    %689 = vsyncpa [#allocation3], 1
    %690 = vsyncpa [#allocation5], 1
    %691 = vsyncpa [#allocation8], 1
    %692 = vsyncpa [#allocation11], 1

</llo_original>
